<compile_context>
chip_gen: v5e
topology: v5e:2x2
jax: 0.10.0
libtpu: 0.0.40
codegen_flags: <defaults>
</compile_context>

<pallas_src>
import math

import jax
import jax.numpy as jnp
from jax.experimental import pallas as pl
from jax.experimental.pallas import tpu as pltpu


def _rel_pos_emb_kernel(pj_ref, pi_ref, o_ref):
    """e_flat[b, i, j*H+h] = p[b,j,h] - p[b,i,h]  (matches d = c[j] - c[i]).

    pj_ref : (1, 1,  TJ*H)  p for the j-tile, (j,h) flattened on the lane axis
    pi_ref : (1, TI, TJ*H)  p for the i-tile, replicated TJ times along lanes
    o_ref  : (1, TI, TJ*H)  lane-dense output block
    """
    # Single VPU subtract; (1,1,L) broadcasts over the TI sublanes of (1,TI,L).
    o_ref[...] = pj_ref[...] - pi_ref[...]


def _largest_divisor(n, cap, multiple_of):
    """Largest d <= cap with n % d == 0 and d % multiple_of == 0; fall back to n (full extent)."""
    for d in range(min(n, cap), 0, -1):
        if n % d == 0 and d % multiple_of == 0:
            return d
    return n


def _pick_tiles(N, H):
    # TI: rows per output block -> multiple of 8 (sublane) or the full extent N.
    TI = _largest_divisor(N, 256, 8)
    # TJ: columns per output block -> TJ*H multiple of 128 (lane-dense stores) or full extent.
    m = 128 // math.gcd(H, 128)                    # smallest TJ making TJ*H % 128 == 0
    cap = max(m, (2048 + H - 1) // H)              # target ~2048-lane output blocks (~2 MiB f32
    TJ = None                                      # at TI=256: fits 64 MiB-VMEM v7x w/ dbl-buffer)
    for d in range(min(N, cap), 0, -1):
        if N % d == 0 and (d * H) % 128 == 0:
            TJ = d
            break
    if TJ is None:
        TJ = N                                     # full extent: always a legal last-dim block
    return TI, TJ


def relative_positional_embedding_3d(c, weight):
    """c: (B, N, 3) coordinates.  weight: (H, 3) torch.nn.Linear(3, H, bias=False) weight."""
    B, N, C = c.shape
    assert C == 3
    H = weight.shape[0]
    dtype = c.dtype

    # Algebraic rewrite: p[b,n,h] = sum_k c[b,n,k] * W[h,k]   (tiny matmul, done by XLA).
    p = jnp.einsum(
        "bnk,hk->bnh", c, weight.astype(dtype), preferred_element_type=jnp.float32
    ).astype(dtype)                                               # (B, N, H)

    TI, TJ = _pick_tiles(N, H)

    # Lane-dense operand layouts prepared outside the kernel (tiny arrays, free reshapes):
    #   j-operand: p flattened over (j, h) -> one (1, TJ*H) row per j-tile.
    #   i-operand: p[b,n,:] replicated TJ times along lanes -> pi_rep[b,n,t*H+h] = p[b,n,h].
    p_flat = p.reshape(B, 1, N * H)
    p_rep = jnp.tile(p, (1, 1, TJ))                               # (B, N, TJ*H)

    grid = (B, N // TI, N // TJ)

    out_flat = pl.pallas_call(
        _rel_pos_emb_kernel,
        out_shape=jax.ShapeDtypeStruct((B, N, N * H), dtype),
        grid=grid,
        in_specs=[
            # j-operand row: changes with the j grid axis only.
            pl.BlockSpec((1, 1, TJ * H), lambda b, i, j: (b, 0, j)),
            # i-operand slab: constant across j -> fetched once per (b, i), revisited for all j.
            pl.BlockSpec((1, TI, TJ * H), lambda b, i, j: (b, i, 0)),
        ],
        out_specs=pl.BlockSpec((1, TI, TJ * H), lambda b, i, j: (b, i, j)),
        compiler_params=pltpu.CompilerParams(
            # No accumulation anywhere: every grid point writes a distinct output block,
            # so all axes can be sharded across TensorCores (matters on 2-TC v7x).
            dimension_semantics=("parallel", "parallel", "parallel"),
        ),
    )(p_flat, p_rep)

    # (j, h) are contiguous in HBM -> this reshape is free.
    return out_flat.reshape(B, N, N, H)


def _reference(c, weight):
    d = c[:, None, :, :] - c[:, :, None, :]                       # (B, N, N, 3) = c[j] - c[i]
    return jnp.einsum("bijk,hk->bijh", d, weight)                 # (B, N, N, H)


if __name__ == "__main__":
    key = jax.random.PRNGKey(0)
    k_c, k_w = jax.random.split(key)

    B, N, H = 2, 8, 4                                             # batch, seq, n_heads
    # 3D coordinates.
    c = jax.random.normal(k_c, (B, N, 3), dtype=jnp.float32)
    # Deterministic init mirroring torch.nn.init.uniform_(weight, a=0.0, b=1.0).
    weight = jax.random.uniform(k_w, (H, 3), dtype=jnp.float32, minval=0.0, maxval=1.0)

    out = relative_positional_embedding_3d(c, weight)
    out = jax.block_until_ready(out)

    ref = _reference(c, weight)
    assert out.shape == (B, N, N, H)
    assert jnp.allclose(out, ref, atol=1e-5, rtol=1e-5), "mismatch vs reference"

    print("KERNEL_OK")
</pallas_src>

<mosaic_0001>
module attributes {stable_mosaic.version = 11 : i64} {
  func.func @_rel_pos_emb_kernel(%arg0: i32, %arg1: i32, %arg2: i32, %arg3: memref<1x1x32xf32, #tpu.memory_space<vmem>>, %arg4: memref<1x8x32xf32, #tpu.memory_space<vmem>>, %arg5: memref<1x8x32xf32, #tpu.memory_space<vmem>>) attributes {dimension_semantics = [#tpu.dimension_semantics<parallel>, #tpu.dimension_semantics<parallel>, #tpu.dimension_semantics<parallel>], iteration_bounds = array<i64: 2, 1, 1>, scalar_prefetch = 0 : i64, scratch_operands = 0 : i64, tpu.core_type = #tpu.core_type<tc>, window_params = [{transform_indices = @transform_0, window_bounds = array<i64: 1, 1, 32>}, {transform_indices = @transform_1, window_bounds = array<i64: 1, 8, 32>}, {transform_indices = @transform_2, window_bounds = array<i64: 1, 8, 32>}]} {
    %c0 = arith.constant 0 : index
    %c0_0 = arith.constant 0 : index
    %c0_1 = arith.constant 0 : index
    %0 = vector.load %arg3[%c0, %c0_0, %c0_1] : memref<1x1x32xf32, #tpu.memory_space<vmem>>, vector<1x1x32xf32>
    %c0_2 = arith.constant 0 : index
    %c0_3 = arith.constant 0 : index
    %c0_4 = arith.constant 0 : index
    %1 = vector.load %arg4[%c0_2, %c0_3, %c0_4] : memref<1x8x32xf32, #tpu.memory_space<vmem>>, vector<1x8x32xf32>
    %2 = vector.broadcast %0 : vector<1x1x32xf32> to vector<1x8x32xf32>
    %3 = arith.subf %2, %1 : vector<1x8x32xf32>
    %c0_5 = arith.constant 0 : index
    %c0_6 = arith.constant 0 : index
    %c0_7 = arith.constant 0 : index
    %4 = vector.load %arg5[%c0_5, %c0_6, %c0_7] : memref<1x8x32xf32, #tpu.memory_space<vmem>>, vector<1x8x32xf32>
    tpu.vector_store %arg5[%c0_5, %c0_6, %c0_7], %3 {strides = array<i32>} : memref<1x8x32xf32, #tpu.memory_space<vmem>>, vector<1x8x32xf32>,
    return
  }
  func.func @transform_0(%arg0: i32, %arg1: i32, %arg2: i32) -> (i32, i32, i32) {
    %c0_i32 = arith.constant 0 : i32
    %c0_i32_0 = arith.constant 0 : i32
    return %arg0, %c0_i32, %arg2 : i32, i32, i32
  }
  func.func @transform_1(%arg0: i32, %arg1: i32, %arg2: i32) -> (i32, i32, i32) {
    %c0_i32 = arith.constant 0 : i32
    %c0_i32_0 = arith.constant 0 : i32
    return %arg0, %arg1, %c0_i32 : i32, i32, i32
  }
  func.func @transform_2(%arg0: i32, %arg1: i32, %arg2: i32) -> (i32, i32, i32) {
    %c0_i32 = arith.constant 0 : i32
    return %arg0, %arg1, %arg2 : i32, i32, i32
  }
}

</mosaic_0001>

<llo_original>
// kernel: tpu_custom_call.1
$region0: #{tpu_custom_call.1}
  #allocation0 [shape = 'u32[]', space=smem, size = 0x4, offset = 0x4, fixed_abs, tag = 'smem constant byte address 0x4 - core index']
  #allocation1 [shape = 'u32[72,128]{1,0:T(1,128)}', space=vmem, size = 0x9000, scoped, tag = 'internal scratch']
  %s0 = inlined_call_operand.hbm [shape: f32[2,1,32], index: 0, kind: input, shape index: {}]
  %s1 = inlined_call_operand.hbm [shape: f32[2,8,32], index: 1, kind: input, shape index: {}]
  %s2 = inlined_call_operand.hbm [shape: f32[2,8,32], index: 2, kind: output, shape index: {}]
  %s3 = sld [smem:[#allocation0]]
  $region49: #{tpu_custom_call.1} parent=0
    _
  %s5 = ssub.s32 1, %s3
  %s6 = scalar_select 0, %s5, %s3
  $region1: #{tpu_custom_call.1} parent=0
    #allocation2 [shape = 'u8[1024]{0}', space=vmem, size = 0x400, scoped, tag = 'input window, operand 0']
    #allocation3 [shape = 's32[2]{0}', space=sflag, size = 0x8, scoped, tag = 'scoped memory for tpu_custom_call.1']
    #allocation4 [shape = 's32[2]{0}', space=sflag, size = 0x8, scoped, tag = 'scoped memory for tpu_custom_call.1']
    #allocation5 [shape = 'u8[8192]{0}', space=vmem, size = 0x2000, scoped, tag = 'input window, operand 1']
    #allocation6 [shape = 's32[2]{0}', space=sflag, size = 0x8, scoped, tag = 'scoped memory for tpu_custom_call.1']
    #allocation7 [shape = 'u8[8192]{0}', space=vmem, size = 0x2000, scoped, tag = 'output window, operand 0']
    %7 = vsyncpa [#allocation3], 0
    %s8 = scalar_lea.sflag [#allocation3], 1
    %9 = vsyncpa %s8, 0
    %10 = vsyncpa [#allocation6], 0
    %s11 = scalar_lea.sflag [#allocation6], 1
    %12 = vsyncpa %s11, 0
    %13 = vsyncpa [#allocation4], 0
    %s14 = scalar_lea.sflag [#allocation4], 1
    %15 = vsyncpa %s14, 0
    loop: start=0, step=1, limit=4
    $region2: #{tpu_custom_call.1} parent=1 // loop_pre_header
      _
    $region3: #{tpu_custom_call.1} parent=1 // loop_header
      %s17 = sphi 0, %s21
      %p18 = scmp.ge.s32.totalorder %s17, 4
      %s24 = sphi 0, %s43
      %s25 = sphi 0, %s39
      %s26 = sphi 0, %s35
      %s27 = sphi 0, %s24
      %s28 = sphi 0, %s25
      %s29 = sphi 0, %s26
      %s30 = sphi 0, %s27
      %s31 = sphi 0, %s28
      %s32 = sphi 0, %s29
      %s48 = sphi 0, %s50
      %s51 = sphi 0, %s48
      %s52 = sphi 0, %s51
      %s68 = sphi 0, %s52
      %s76 = sphi 0, %s78
      %s79 = sphi 0, %s76
      %s80 = sphi 0, %s79
      %s96 = sphi 0, %s80
      %s106 = sphi 0, %s108
      %s109 = sphi 0, %s106
      %s110 = sphi 0, %s109
      %s126 = sphi 0, %s110
    $region4: #{tpu_custom_call.1} parent=1 // loop_header_branch
      %20 = sbr.rel (%p18) target = $region8
    $region5: #{tpu_custom_call.1} parent=1 // loop_body
      %s22 = ssub.s32 %s17, 1
      %s23 = ssub.s32 %s17, 2
      %s33 = sadd.s32 1, %s26
      %p34 = scmp.ge.s32.totalorder %s33, 1
      %s35 = scalar_select %p34, 0, %s33
      %s36 = sadd.s32 1, %s25
      %s37 = scalar_select %p34, %s36, %s25
      %p38 = scmp.ge.s32.totalorder %s37, 1
      %s39 = scalar_select %p38, 0, %s37
      %s40 = sadd.s32 1, %s24
      %s41 = scalar_select %p38, %s40, %s24
      %p42 = scmp.ge.s32.totalorder %s41, 2
      %s43 = scalar_select %p42, 0, %s41
      %s44 = ssub.s32 %s24, %s43
      %s45 = ssub.s32 %s26, %s35
      %s46 = sor.u32 %s44, %s45
      %p47 = scmp.eq.s32.totalorder %s46, 0
      %s49 = sadd.s32 %s48, 1
      %s50 = scalar_select %p47, %s48, %s49
      %p53 = pneg %p47
      %p54 = scmp.eq.s32.totalorder %s17, 1
      %p55 = por %p53, %p54
      %p56 = scmp.ne.s32.totalorder %s48, %s51
      %p57 = scmp.eq.s32.totalorder %s17, 0
      %p58 = por %p56, %p57
      %p59 = scmp.ne.s32.totalorder %s48, %s51
      %p60 = scmp.eq.s32.totalorder %s22, 1
      %p61 = por %p59, %p60
      %p62 = scmp.ne.s32.totalorder %s51, %s52
      %p63 = scmp.eq.s32.totalorder %s22, 0
      %p64 = por %p62, %p63
      %p65 = scmp.ne.s32.totalorder %s51, %s52
      %p66 = scmp.eq.s32.totalorder %s23, 1
      %p67 = por %p65, %p66
      %p69 = scmp.ne.s32.totalorder %s52, %s68
      %p70 = scmp.eq.s32.totalorder %s23, 0
      %p71 = por %p69, %p70
      %s72 = ssub.s32 %s24, %s43
      %s73 = ssub.s32 %s25, %s39
      %s74 = sor.u32 %s72, %s73
      %p75 = scmp.eq.s32.totalorder %s74, 0
      %s77 = sadd.s32 %s76, 1
      %s78 = scalar_select %p75, %s76, %s77
      %p81 = pneg %p75
      %p82 = scmp.eq.s32.totalorder %s17, 1
      %p83 = por %p81, %p82
      %p84 = scmp.ne.s32.totalorder %s76, %s79
      %p85 = scmp.eq.s32.totalorder %s17, 0
      %p86 = por %p84, %p85
      %p87 = scmp.ne.s32.totalorder %s76, %s79
      %p88 = scmp.eq.s32.totalorder %s22, 1
      %p89 = por %p87, %p88
      %p90 = scmp.ne.s32.totalorder %s79, %s80
      %p91 = scmp.eq.s32.totalorder %s22, 0
      %p92 = por %p90, %p91
      %p93 = scmp.ne.s32.totalorder %s79, %s80
      %p94 = scmp.eq.s32.totalorder %s23, 1
      %p95 = por %p93, %p94
      %p97 = scmp.ne.s32.totalorder %s80, %s96
      %p98 = scmp.eq.s32.totalorder %s23, 0
      %p99 = por %p97, %p98
      %s100 = ssub.s32 %s24, %s43
      %s101 = ssub.s32 %s25, %s39
      %s102 = sor.u32 %s100, %s101
      %s103 = ssub.s32 %s26, %s35
      %s104 = sor.u32 %s102, %s103
      %p105 = scmp.eq.s32.totalorder %s104, 0
      %s107 = sadd.s32 %s106, 1
      %s108 = scalar_select %p105, %s106, %s107
      %p111 = pneg %p105
      %p112 = scmp.eq.s32.totalorder %s17, 1
      %p113 = por %p111, %p112
      %p114 = scmp.ne.s32.totalorder %s106, %s109
      %p115 = scmp.eq.s32.totalorder %s17, 0
      %p116 = por %p114, %p115
      %p117 = scmp.ne.s32.totalorder %s106, %s109
      %p118 = scmp.eq.s32.totalorder %s22, 1
      %p119 = por %p117, %p118
      %p120 = scmp.ne.s32.totalorder %s109, %s110
      %p121 = scmp.eq.s32.totalorder %s22, 0
      %p122 = por %p120, %p121
      %p123 = scmp.ne.s32.totalorder %s109, %s110
      %p124 = scmp.eq.s32.totalorder %s23, 1
      %p125 = por %p123, %p124
      %p127 = scmp.ne.s32.totalorder %s110, %s126
      %p128 = scmp.eq.s32.totalorder %s23, 0
      %p129 = por %p127, %p128
      %p130 = scmp.le.s32.totalorder 1, %s17
      %p131 = scmp.lt.s32.totalorder %s17, 3
      %p132 = pnand %p130, %p131
      %p133 = pneg %p132
      // Predicated region
      $region9: #{tpu_custom_call.1} parent=5 // pred_check
        _
      $region10: #{tpu_custom_call.1} parent=5 // pred_check_branch
        %135 = sbr.rel (%p132) target = $region12
      $region11: #{tpu_custom_call.1} parent=5 // pred_region
        %s136 = ssub.s32 %s17, 1
      $region12: #{tpu_custom_call.1} parent=5 // pred_fallthru
        _
      %p137 = scmp.lt.s32.totalorder %s17, 2
      // Predicated region
      $region13: #{tpu_custom_call.1} parent=5 // pred_check
        %p138 = pneg %p137
      $region14: #{tpu_custom_call.1} parent=5 // pred_check_branch
        %140 = sbr.rel (%p138) target = $region16
      $region15: #{tpu_custom_call.1} parent=5 // pred_region
        // Predicated region
        $region17: #{tpu_custom_call.1} parent=15 // pred_check
          %p141 = pneg %p58
        $region18: #{tpu_custom_call.1} parent=15 // pred_check_branch
          %143 = sbr.rel (%p141) target = $region20
        $region19: #{tpu_custom_call.1} parent=15 // pred_region
          %s144 = sand.u32 %s48, 1
          %s145 = scalar_lea.sflag [#allocation3], %s144
          %s146 = sand.u32 %s48, 1
          %s147 = scalar_lea.vmem [#allocation2], %s146
          %149 = vsyncadd %s145, 0
          %s150 = sadd.s32 %s26, %s24
          %s151 = scalar_lea.hbm %s0, %s150
          %s153 = sshll.u32 %s151, 4
          %s154 = int_to_ptr.hbm [resolvable:$true] %s153
          %s155 = sshll.u32 %s147, 4
          %s156 = int_to_ptr.vmem [resolvable:$true] %s155
          %158 = dma.hbm_to_vmem [thread:$0]  %s154, 16, %s156, %s145
        $region20: #{tpu_custom_call.1} parent=15 // pred_fallthru
          _
        // Predicated region
        $region21: #{tpu_custom_call.1} parent=15 // pred_check
          %p159 = pneg %p86
        $region22: #{tpu_custom_call.1} parent=15 // pred_check_branch
          %161 = sbr.rel (%p159) target = $region24
        $region23: #{tpu_custom_call.1} parent=15 // pred_region
          %s162 = sand.u32 %s76, 1
          %s163 = scalar_lea.sflag [#allocation6], %s162
          %s164 = sand.u32 %s76, 1
          %s165 = smul.addr %s164, 8
          %s166 = scalar_lea.vmem [#allocation5], %s165
          %168 = vsyncadd %s163, 0
          %s169 = sadd.s32 %s25, %s24
          %s170 = smul.addr %s169, 8
          %s171 = scalar_lea.hbm %s1, %s170
          %s173 = sshll.u32 %s171, 4
          %s174 = int_to_ptr.hbm [resolvable:$true] %s173
          %s175 = sshll.u32 %s166, 4
          %s176 = int_to_ptr.vmem [resolvable:$true] %s175
          %178 = dma.hbm_to_vmem [thread:$0]  %s174, 128, %s176, %s163
        $region24: #{tpu_custom_call.1} parent=15 // pred_fallthru
          _
      $region16: #{tpu_custom_call.1} parent=5 // pred_fallthru
        _
      %p179 = scmp.le.s32.totalorder 1, %s17
      %p180 = scmp.lt.s32.totalorder %s17, 3
      %p181 = pnand %p179, %p180
      %p182 = pneg %p181
      // Predicated region
      $region25: #{tpu_custom_call.1} parent=5 // pred_check
        _
      $region26: #{tpu_custom_call.1} parent=5 // pred_check_branch
        %184 = sbr.rel (%p181) target = $region28
      $region27: #{tpu_custom_call.1} parent=5 // pred_region
        %s185 = ssub.s32 %s17, 1
        %s186 = sand.u32 %s51, 1
        %s187 = scalar_lea.sflag [#allocation3], %s186
        %s188 = sand.u32 %s51, 1
        %s189 = scalar_lea.vmem [#allocation2], %s188
        // Predicated region
        $region29: #{tpu_custom_call.1} parent=27 // pred_check
          %p190 = pneg %p64
        $region30: #{tpu_custom_call.1} parent=27 // pred_check_branch
          %192 = sbr.rel (%p190) target = $region32
        $region31: #{tpu_custom_call.1} parent=27 // pred_region
          %194 = dma.done %s187, 16
        $region32: #{tpu_custom_call.1} parent=27 // pred_fallthru
          _
        %s195 = sand.u32 %s79, 1
        %s196 = scalar_lea.sflag [#allocation6], %s195
        %s197 = sand.u32 %s79, 1
        %s198 = smul.addr %s197, 8
        %s199 = scalar_lea.vmem [#allocation5], %s198
        // Predicated region
        $region33: #{tpu_custom_call.1} parent=27 // pred_check
          %p200 = pneg %p92
        $region34: #{tpu_custom_call.1} parent=27 // pred_check_branch
          %202 = sbr.rel (%p200) target = $region36
        $region35: #{tpu_custom_call.1} parent=27 // pred_region
          %204 = dma.done %s196, 128
        $region36: #{tpu_custom_call.1} parent=27 // pred_fallthru
          _
        %s205 = sand.u32 %s51, 1
        %s206 = scalar_lea.sflag [#allocation3], %s205
        %s207 = sand.u32 %s51, 1
        %s208 = scalar_lea.vmem [#allocation2], %s207
        %p209 = pneg %p64
        %p210 = pneg %p61
        %s211 = sand.u32 %s79, 1
        %s212 = scalar_lea.sflag [#allocation6], %s211
        %s213 = sand.u32 %s79, 1
        %s214 = smul.addr %s213, 8
        %s215 = scalar_lea.vmem [#allocation5], %s214
        %p216 = pneg %p92
        %p217 = pneg %p89
        %p218 = pneg %p122
        %p219 = pneg %p119
        %s220 = sand.u32 %s109, 1
        %s221 = scalar_lea.sflag [#allocation4], %s220
        %s222 = sand.u32 %s109, 1
        %s223 = smul.addr %s222, 8
        %s224 = scalar_lea.vmem [#allocation7], %s223
        %v225 = vld [vmem:[%s189] sm:$0x1]
        %v226 = vld [vmem:[%s199] sm:$0xff]
        %v228 = vperm.slane %v225, 0
        %v230 = vsub.f32 %v228, %v226
        %vm231 = vcmask 261120
        %232 = vst.msk [vmem:[%s224] sm:$0xff] %vm231, %v230
        %s233 = sand.u32 %s109, 1
        %s234 = scalar_lea.sflag [#allocation4], %s233
        %s235 = sand.u32 %s109, 1
        %s236 = smul.addr %s235, 8
        %s237 = scalar_lea.vmem [#allocation7], %s236
        // Predicated region
        $region37: #{tpu_custom_call.1} parent=27 // pred_check
          %p238 = pneg %p119
        $region38: #{tpu_custom_call.1} parent=27 // pred_check_branch
          %240 = sbr.rel (%p238) target = $region40
        $region39: #{tpu_custom_call.1} parent=27 // pred_region
          %242 = vsyncadd %s234, 0
          %s243 = sadd.s32 %s29, %s28
          %s244 = sadd.s32 %s243, %s27
          %s245 = smul.addr %s244, 8
          %s246 = scalar_lea.hbm %s2, %s245
          %s248 = sshll.u32 %s237, 4
          %s249 = int_to_ptr.vmem [resolvable:$true] %s248
          %s250 = sshll.u32 %s246, 4
          %s251 = int_to_ptr.hbm [resolvable:$true] %s250
          %253 = dma.vmem_to_hbm [thread:$0]  %s249, 128, %s251, %s234
        $region40: #{tpu_custom_call.1} parent=27 // pred_fallthru
          _
      $region28: #{tpu_custom_call.1} parent=5 // pred_fallthru
        _
      %p254 = scmp.le.s32.totalorder 2, %s17
      // Predicated region
      $region41: #{tpu_custom_call.1} parent=5 // pred_check
        %p255 = pneg %p254
      $region42: #{tpu_custom_call.1} parent=5 // pred_check_branch
        %257 = sbr.rel (%p255) target = $region44
      $region43: #{tpu_custom_call.1} parent=5 // pred_region
        %s258 = ssub.s32 %s17, 2
        // Predicated region
        $region45: #{tpu_custom_call.1} parent=43 // pred_check
          %p259 = pneg %p125
        $region46: #{tpu_custom_call.1} parent=43 // pred_check_branch
          %261 = sbr.rel (%p259) target = $region48
        $region47: #{tpu_custom_call.1} parent=43 // pred_region
          %s262 = sand.u32 %s110, 1
          %s263 = scalar_lea.sflag [#allocation4], %s262
          %s264 = sand.u32 %s110, 1
          %s265 = smul.addr %s264, 8
          %s266 = scalar_lea.vmem [#allocation7], %s265
          %268 = dma.done %s263, 128
        $region48: #{tpu_custom_call.1} parent=43 // pred_fallthru
          _
      $region44: #{tpu_custom_call.1} parent=5 // pred_fallthru
        _
    $region6: #{tpu_custom_call.1} parent=1 // loop_footer
      %s21 = sadd.s32 1, %s17
    $region7: #{tpu_custom_call.1} parent=1 // loop_footer_branch
      %16 = sbr.rel target = $region3
    $region8: #{tpu_custom_call.1} parent=1 // loop_exit
      _
    %269 = vsyncpa [#allocation3], 1
    %s270 = scalar_lea.sflag [#allocation3], 1
    %271 = vsyncpa %s270, 1
    %272 = vsyncpa [#allocation6], 1
    %s273 = scalar_lea.sflag [#allocation6], 1
    %274 = vsyncpa %s273, 1
    %275 = vsyncpa [#allocation4], 1
    %s276 = scalar_lea.sflag [#allocation4], 1
    %277 = vsyncpa %s276, 1

</llo_original>
